<compile_context>
chip_gen: v6e
topology: v6e:2x2x1
jax: 0.10.0
libtpu: 0.0.40
codegen_flags: <defaults>
</compile_context>

<pallas_src>
import math

import jax
import jax.numpy as jnp
from jax.experimental import pallas as pl
from jax.experimental.pallas import tpu as pltpu

NUM_CLASSES = 11
LEAKY_SLOPE = 0.01                         # nn.LeakyReLU default negative_slope
_VMEM_BUDGET_BYTES = 24 * 1024 * 1024      # conservative: fits v5e/v6e/v7x scoped VMEM
_VMEM_LIMIT_BYTES = 32 * 1024 * 1024


def _round_up(x, m):
    return (x + m - 1) // m * m


def _pick_tm(n, d):
    """Row tile: ~1 MiB bf16 x tile per pipeline buffer (>=1024 rows), VMEM-budgeted."""
    tm = max(1024, 1_000_000 // max(1, 2 * d))
    # 2 double-buffered streamed tiles (x bf16 + labels i32) + single-buffered weights.
    resident = 2 * d * d + 4 * d + 2 * d * NUM_CLASSES + 4 * NUM_CLASSES
    per_row = 2 * (2 * d + 4)
    avail = _VMEM_BUDGET_BYTES - resident - 2 * (8 * 128 * 4)
    if avail > 0:
        tm = min(tm, max(16, avail // per_row))
    tm = max(16, (tm // 16) * 16)            # bf16 sublane packing
    return min(tm, _round_up(n, 16))


def _dann_loss_kernel(x_ref, w1_ref, b1_ref, w2_ref, b2_ref, lab_ref, out_ref):
    # ---- critic MLP (bf16 MXU operands, f32 accumulation) ----
    h = jnp.dot(x_ref[...], w1_ref[...],
                preferred_element_type=jnp.float32) + b1_ref[...]            # (TM, D) f32
    h = jnp.where(h > 0, h, LEAKY_SLOPE * h)                                 # LeakyReLU
    logits = jnp.dot(h.astype(jnp.bfloat16), w2_ref[...],
                     preferred_element_type=jnp.float32) + b2_ref[...]       # (TM, 11)

    # ---- numerically stable log-softmax cross entropy ----
    m = jnp.max(logits, axis=-1, keepdims=True)                              # (TM, 1)
    lse = m + jnp.log(jnp.sum(jnp.exp(logits - m), axis=-1, keepdims=True))
    labels = lab_ref[...]                                                    # (TM, 1) int32
    class_ids = jax.lax.broadcasted_iota(jnp.int32, logits.shape, 1)
    onehot = (class_ids == labels).astype(jnp.float32)
    picked = jnp.sum(logits * onehot, axis=-1, keepdims=True)                # (TM, 1)

    # Padded rows carry label = -1 -> weight 0.  One partial sum per tile (no carried
    # accumulator), so the grid axis stays "parallel" for megacore sharding.
    weight = (labels >= 0).astype(jnp.float32)
    partial = jnp.sum((lse - picked) * weight)

    # Scalar partial at [0, 0, 0] of this tile's lane-dense (1, 8, 128) output block.
    row = jax.lax.broadcasted_iota(jnp.int32, out_ref.shape, 1)
    col = jax.lax.broadcasted_iota(jnp.int32, out_ref.shape, 2)
    out_ref[...] = jnp.where((row == 0) & (col == 0), partial, jnp.float32(0.0))


def dann_loss(x, genre_label, params, *, tm=None):
    """x: (..., D) float32, genre_label: (...,) int, params: dict of critic weights."""
    D = params["w1"].shape[0]
    x2d = x.reshape(-1, D)                               # glue: reshape in plain JAX
    labels = genre_label.reshape(-1).astype(jnp.int32)
    n = x2d.shape[0]
    # GradReverse.grad_reverse is the identity in the forward pass.
    # TODO(synk): backward-pass gradient reversal (custom_vjp) not implemented; forward only.

    if tm is None:
        tm = _pick_tm(n, D)
    else:
        tm = max(16, (tm // 16) * 16)
        tm = min(tm, _round_up(n, 16))
    n_pad = _round_up(n, tm)
    if n_pad != n:
        x2d = jnp.pad(x2d, ((0, n_pad - n), (0, 0)))
        labels = jnp.pad(labels, (0, n_pad - n), constant_values=-1)   # masked in kernel

    x_bf16 = x2d.astype(jnp.bfloat16)                    # only O(N) array: halve HBM bytes
    w1_bf16 = params["w1"].astype(jnp.bfloat16)
    w2_bf16 = params["w2"].astype(jnp.bfloat16)
    labels2d = labels.reshape(n_pad, 1)
    num_tiles = n_pad // tm

    flops = 2 * n_pad * (D * D + D * NUM_CLASSES)
    bytes_accessed = (2 * n_pad * D + 4 * n_pad                 # x bf16 + labels i32
                      + 2 * D * D + 4 * D                       # w1 bf16 + b1 f32
                      + 2 * D * NUM_CLASSES + 4 * NUM_CLASSES   # w2 bf16 + b2 f32
                      + num_tiles * 8 * 128 * 4)                # per-tile partial slabs

    grid_spec = pltpu.PrefetchScalarGridSpec(
        num_scalar_prefetch=0,
        grid=(num_tiles,),
        in_specs=[
            pl.BlockSpec((tm, D), lambda i: (i, 0)),                 # x: streamed
            pl.BlockSpec(memory_space=pltpu.MemorySpace.VMEM),       # w1: resident, 1x
            pl.BlockSpec(memory_space=pltpu.MemorySpace.VMEM),       # b1: resident
            pl.BlockSpec(memory_space=pltpu.MemorySpace.VMEM),       # w2: resident
            pl.BlockSpec(memory_space=pltpu.MemorySpace.VMEM),       # b2: resident
            pl.BlockSpec((tm, 1), lambda i: (i, 0)),                 # labels: streamed
        ],
        out_specs=pl.BlockSpec((1, 8, 128), lambda i: (i, 0, 0)),    # per-tile partial
        scratch_shapes=[],
    )

    partials = pl.pallas_call(
        _dann_loss_kernel,
        out_shape=jax.ShapeDtypeStruct((num_tiles, 8, 128), jnp.float32),
        grid_spec=grid_spec,
        compiler_params=pltpu.CompilerParams(
            dimension_semantics=("parallel",),       # tiles independent -> both v7x TCs
            vmem_limit_bytes=_VMEM_LIMIT_BYTES,
        ),
        cost_estimate=pl.CostEstimate(
            flops=flops,
            transcendentals=n_pad * (NUM_CLASSES + 1),
            bytes_accessed=bytes_accessed,
        ),
    )(x_bf16, w1_bf16, params["b1"].reshape(1, D), w2_bf16,
      params["b2"].reshape(1, NUM_CLASSES), labels2d)

    return jnp.sum(partials) / jnp.float32(n)


def init_params(key, embedding_dim):
    """Deterministic init mirroring kaiming_uniform_(a=0.01) + zero bias."""
    k1, k2 = jax.random.split(key)

    def kaiming_uniform(k, fan_in, fan_out):
        gain = math.sqrt(2.0 / (1.0 + LEAKY_SLOPE ** 2))
        bound = gain * math.sqrt(3.0 / fan_in)
        # stored as (in, out) so kernel computes x @ W  (== PyTorch x @ weight.T)
        return jax.random.uniform(k, (fan_in, fan_out), jnp.float32, -bound, bound)

    return {
        "w1": kaiming_uniform(k1, embedding_dim, embedding_dim),
        "b1": jnp.zeros((embedding_dim,), jnp.float32),
        "w2": kaiming_uniform(k2, embedding_dim, NUM_CLASSES),
        "b2": jnp.zeros((NUM_CLASSES,), jnp.float32),
    }


def _reference_loss(x, genre_label, params, matmul_dtype=jnp.bfloat16):
    D = params["w1"].shape[0]
    x2d = x.reshape(-1, D)
    labels = genre_label.reshape(-1)
    h = jnp.dot(x2d.astype(matmul_dtype), params["w1"].astype(matmul_dtype),
                preferred_element_type=jnp.float32) + params["b1"]
    h = jnp.where(h > 0, h, LEAKY_SLOPE * h)
    logits = jnp.dot(h.astype(matmul_dtype), params["w2"].astype(matmul_dtype),
                     preferred_element_type=jnp.float32) + params["b2"]
    logp = jax.nn.log_softmax(logits, axis=-1)
    return -jnp.mean(jnp.take_along_axis(logp, labels[:, None], axis=-1))


if __name__ == "__main__":
    embedding_dim = 32
    key = jax.random.PRNGKey(0)
    kx, kl, kp = jax.random.split(key, 3)

    # small shapes: batch=3, seq=7, hidden=32  ->  flattened to (21, 32).
    x = jax.random.normal(kx, (3, 7, embedding_dim), dtype=jnp.float32)
    genre_label = jax.random.randint(kl, (3, 7), 0, NUM_CLASSES, dtype=jnp.int32)
    params = init_params(kp, embedding_dim)

    # tm=16 forces a 2-step grid with remainder rows (parallel partial-sum + mask path).
    loss_small_tile = dann_loss(x, genre_label, params, tm=16)
    # auto tm exercises the budgeted single-tile path.
    loss_auto = dann_loss(x, genre_label, params)
    jax.block_until_ready(loss_small_tile)
    jax.block_until_ready(loss_auto)

    # Tight check vs a reference that mirrors the kernel's bf16 matmul operands,
    # loose sanity check vs the full-f32 reference (original module numerics).
    ref_bf16 = _reference_loss(x, genre_label, params, matmul_dtype=jnp.bfloat16)
    ref_f32 = _reference_loss(x, genre_label, params, matmul_dtype=jnp.float32)
    for loss in (loss_small_tile, loss_auto):
        assert jnp.allclose(loss, ref_bf16, atol=1e-4, rtol=1e-4), (loss, ref_bf16)
        assert jnp.allclose(loss, ref_f32, atol=5e-2, rtol=5e-2), (loss, ref_f32)
    assert jnp.allclose(loss_small_tile, loss_auto, atol=1e-5, rtol=1e-5)

    print("KERNEL_OK")
</pallas_src>

<mosaic_0001>
module attributes {stable_mosaic.version = 11 : i64} {
  func.func @_dann_loss_kernel(%arg0: i32, %arg1: memref<16x32xbf16, #tpu.memory_space<vmem>>, %arg2: memref<32x32xbf16, #tpu.memory_space<vmem>>, %arg3: memref<1x32xf32, #tpu.memory_space<vmem>>, %arg4: memref<32x11xbf16, #tpu.memory_space<vmem>>, %arg5: memref<1x11xf32, #tpu.memory_space<vmem>>, %arg6: memref<16x1xi32, #tpu.memory_space<vmem>>, %arg7: memref<1x8x128xf32, #tpu.memory_space<vmem>>) attributes {dimension_semantics = [#tpu.dimension_semantics<parallel>], iteration_bounds = array<i64: 2>, scalar_prefetch = 0 : i64, scratch_operands = 0 : i64, tpu.core_type = #tpu.core_type<tc>, window_params = [{transform_indices = @transform_0, window_bounds = array<i64: 16, 32>}, {pipeline_mode = #tpu.pipeline_mode<synchronous>, transform_indices = @transform_1, window_bounds = array<i64: 32, 32>}, {pipeline_mode = #tpu.pipeline_mode<synchronous>, transform_indices = @transform_2, window_bounds = array<i64: 1, 32>}, {pipeline_mode = #tpu.pipeline_mode<synchronous>, transform_indices = @transform_3, window_bounds = array<i64: 32, 11>}, {pipeline_mode = #tpu.pipeline_mode<synchronous>, transform_indices = @transform_4, window_bounds = array<i64: 1, 11>}, {transform_indices = @transform_5, window_bounds = array<i64: 16, 1>}, {transform_indices = @transform_6, window_bounds = array<i64: 1, 8, 128>}]} {
    %c0 = arith.constant 0 : index
    %c0_0 = arith.constant 0 : index
    %0 = vector.load %arg1[%c0, %c0_0] : memref<16x32xbf16, #tpu.memory_space<vmem>>, vector<16x32xbf16>
    %c0_1 = arith.constant 0 : index
    %c0_2 = arith.constant 0 : index
    %1 = vector.load %arg2[%c0_1, %c0_2] : memref<32x32xbf16, #tpu.memory_space<vmem>>, vector<32x32xbf16>
    %cst = arith.constant dense<0.000000e+00> : vector<16x32xf32>
    %2 = tpu.matmul %0, %1, %cst {dimension_numbers = #tpu.dot_dimension_numbers<[1], [0], [0], [1], [0, 0, 1, 1], [], []>} : vector<16x32xbf16>, vector<32x32xbf16>, vector<16x32xf32> -> vector<16x32xf32>
    %c0_3 = arith.constant 0 : index
    %c0_4 = arith.constant 0 : index
    %3 = vector.load %arg3[%c0_3, %c0_4] : memref<1x32xf32, #tpu.memory_space<vmem>>, vector<1x32xf32>
    %4 = vector.broadcast %3 : vector<1x32xf32> to vector<16x32xf32>
    %5 = arith.addf %2, %4 : vector<16x32xf32>
    %cst_5 = arith.constant 0.000000e+00 : f32
    %6 = vector.broadcast %cst_5 : f32 to vector<16x32xf32>
    %7 = arith.cmpf ogt, %5, %6 : vector<16x32xf32>
    %cst_6 = arith.constant 0.00999999977 : f32
    %8 = vector.broadcast %cst_6 : f32 to vector<16x32xf32>
    %9 = arith.mulf %8, %5 : vector<16x32xf32>
    %10 = arith.select %7, %5, %9 : vector<16x32xi1>, vector<16x32xf32>
    %11 = arith.truncf %10 : vector<16x32xf32> to vector<16x32xbf16>
    %c0_7 = arith.constant 0 : index
    %c0_8 = arith.constant 0 : index
    %12 = vector.load %arg4[%c0_7, %c0_8] : memref<32x11xbf16, #tpu.memory_space<vmem>>, vector<32x11xbf16>
    %cst_9 = arith.constant dense<0.000000e+00> : vector<16x11xf32>
    %13 = tpu.matmul %11, %12, %cst_9 {dimension_numbers = #tpu.dot_dimension_numbers<[1], [0], [0], [1], [0, 0, 1, 1], [], []>} : vector<16x32xbf16>, vector<32x11xbf16>, vector<16x11xf32> -> vector<16x11xf32>
    %c0_10 = arith.constant 0 : index
    %c0_11 = arith.constant 0 : index
    %14 = vector.load %arg5[%c0_10, %c0_11] : memref<1x11xf32, #tpu.memory_space<vmem>>, vector<1x11xf32>
    %15 = vector.broadcast %14 : vector<1x11xf32> to vector<16x11xf32>
    %16 = arith.addf %13, %15 : vector<16x11xf32>
    %cst_12 = arith.constant dense<0xFF800000> : vector<16xf32>
    %17 = vector.multi_reduction <maximumf>, %16, %cst_12 [1] : vector<16x11xf32> to vector<16xf32>
    %18 = vector.shape_cast %17 : vector<16xf32> to vector<16x1xf32>
    %19 = vector.broadcast %18 : vector<16x1xf32> to vector<16x11xf32>
    %20 = arith.subf %16, %19 : vector<16x11xf32>
    %21 = math.exp %20 : vector<16x11xf32>
    %cst_13 = arith.constant dense<0.000000e+00> : vector<16xf32>
    %22 = vector.multi_reduction <add>, %21, %cst_13 [1] : vector<16x11xf32> to vector<16xf32>
    %23 = vector.shape_cast %22 : vector<16xf32> to vector<16x1xf32>
    %24 = math.log %23 : vector<16x1xf32>
    %25 = arith.addf %18, %24 : vector<16x1xf32>
    %c0_14 = arith.constant 0 : index
    %c0_15 = arith.constant 0 : index
    %26 = vector.load %arg6[%c0_14, %c0_15] : memref<16x1xi32, #tpu.memory_space<vmem>>, vector<16x1xi32>
    %27 = tpu.iota {dimensions = array<i32: 1>} : vector<16x11xi32>
    %28 = vector.broadcast %26 : vector<16x1xi32> to vector<16x11xi32>
    %29 = arith.cmpi eq, %27, %28 : vector<16x11xi32>
    %30 = arith.extui %29 : vector<16x11xi1> to vector<16x11xi32>
    %31 = arith.sitofp %30 : vector<16x11xi32> to vector<16x11xf32>
    %32 = arith.mulf %16, %31 : vector<16x11xf32>
    %cst_16 = arith.constant dense<0.000000e+00> : vector<16xf32>
    %33 = vector.multi_reduction <add>, %32, %cst_16 [1] : vector<16x11xf32> to vector<16xf32>
    %34 = vector.shape_cast %33 : vector<16xf32> to vector<16x1xf32>
    %c0_i32 = arith.constant 0 : i32
    %35 = vector.broadcast %c0_i32 : i32 to vector<16x1xi32>
    %36 = arith.cmpi sge, %26, %35 : vector<16x1xi32>
    %37 = arith.extui %36 : vector<16x1xi1> to vector<16x1xi32>
    %38 = arith.sitofp %37 : vector<16x1xi32> to vector<16x1xf32>
    %39 = arith.subf %25, %34 : vector<16x1xf32>
    %40 = arith.mulf %39, %38 : vector<16x1xf32>
    %41 = vector.shape_cast %40 : vector<16x1xf32> to vector<1x16x1xf32>
    %cst_17 = arith.constant dense<0.000000e+00> : vector<1xf32>
    %42 = vector.multi_reduction <add>, %41, %cst_17 [1, 2] : vector<1x16x1xf32> to vector<1xf32>
    %43 = vector.shape_cast %42 : vector<1xf32> to vector<1x1x1xf32>
    %44 = vector.extract %43[0, 0, 0] : f32 from vector<1x1x1xf32>
    %45 = tpu.iota {dimensions = array<i32: 1>} : vector<1x8x128xi32>
    %46 = tpu.iota {dimensions = array<i32: 2>} : vector<1x8x128xi32>
    %c0_i32_18 = arith.constant 0 : i32
    %47 = vector.broadcast %c0_i32_18 : i32 to vector<1x8x128xi32>
    %48 = arith.cmpi eq, %45, %47 : vector<1x8x128xi32>
    %c0_i32_19 = arith.constant 0 : i32
    %49 = vector.broadcast %c0_i32_19 : i32 to vector<1x8x128xi32>
    %50 = arith.cmpi eq, %46, %49 : vector<1x8x128xi32>
    %51 = arith.andi %48, %50 : vector<1x8x128xi1>
    %cst_20 = arith.constant 0.000000e+00 : f32
    %52 = vector.broadcast %44 : f32 to vector<1x8x128xf32>
    %53 = vector.broadcast %cst_20 : f32 to vector<1x8x128xf32>
    %54 = arith.select %51, %52, %53 : vector<1x8x128xi1>, vector<1x8x128xf32>
    %c0_21 = arith.constant 0 : index
    %c0_22 = arith.constant 0 : index
    %c0_23 = arith.constant 0 : index
    %55 = vector.load %arg7[%c0_21, %c0_22, %c0_23] : memref<1x8x128xf32, #tpu.memory_space<vmem>>, vector<1x8x128xf32>
    tpu.vector_store %arg7[%c0_21, %c0_22, %c0_23], %54 {strides = array<i32>} : memref<1x8x128xf32, #tpu.memory_space<vmem>>, vector<1x8x128xf32>,
    return
  }
  func.func @transform_0(%arg0: i32) -> (i32, i32) {
    %c0_i32 = arith.constant 0 : i32
    %c0_i32_0 = arith.constant 0 : i32
    return %arg0, %c0_i32 : i32, i32
  }
  func.func @transform_1(%arg0: i32) -> (i32, i32) {
    %c0_i32 = arith.constant 0 : i32
    %c0_i32_0 = arith.constant 0 : i32
    %c0_i32_1 = arith.constant 0 : i32
    return %c0_i32, %c0_i32_0 : i32, i32
  }
  func.func @transform_2(%arg0: i32) -> (i32, i32) {
    %c0_i32 = arith.constant 0 : i32
    %c0_i32_0 = arith.constant 0 : i32
    %c0_i32_1 = arith.constant 0 : i32
    return %c0_i32, %c0_i32_0 : i32, i32
  }
  func.func @transform_3(%arg0: i32) -> (i32, i32) {
    %c0_i32 = arith.constant 0 : i32
    %c0_i32_0 = arith.constant 0 : i32
    %c0_i32_1 = arith.constant 0 : i32
    return %c0_i32, %c0_i32_0 : i32, i32
  }
  func.func @transform_4(%arg0: i32) -> (i32, i32) {
    %c0_i32 = arith.constant 0 : i32
    %c0_i32_0 = arith.constant 0 : i32
    %c0_i32_1 = arith.constant 0 : i32
    return %c0_i32, %c0_i32_0 : i32, i32
  }
  func.func @transform_5(%arg0: i32) -> (i32, i32) {
    %c0_i32 = arith.constant 0 : i32
    %c0_i32_0 = arith.constant 0 : i32
    return %arg0, %c0_i32 : i32, i32
  }
  func.func @transform_6(%arg0: i32) -> (i32, i32, i32) {
    %c0_i32 = arith.constant 0 : i32
    %c0_i32_0 = arith.constant 0 : i32
    %c0_i32_1 = arith.constant 0 : i32
    return %arg0, %c0_i32, %c0_i32_0 : i32, i32, i32
  }
}

</mosaic_0001>

<llo_original>
// kernel: tpu_custom_call.1
$region0: #{tpu_custom_call.1}
  #allocation0 [shape = 'u32[]', space=smem, size = 0x4, offset = 0x4, fixed_abs, tag = 'smem constant byte address 0x4 - core index']
  #allocation1 [shape = 'u32[144,128]{1,0:T(1,128)}', space=vmem, size = 0x12000, scoped, tag = 'internal scratch']
  %s0 = inlined_call_operand.vmem [shape: bf16[32,32], index: 0, kind: input, shape index: {}]
  %s1 = inlined_call_operand.vmem [shape: bf16[32,32], index: 1, kind: input, shape index: {}]
  %s2 = inlined_call_operand.vmem [shape: f32[1,32], index: 2, kind: input, shape index: {}]
  %s3 = inlined_call_operand.vmem [shape: bf16[32,11], index: 3, kind: input, shape index: {}]
  %s4 = inlined_call_operand.vmem [shape: f32[1,11], index: 4, kind: input, shape index: {}]
  %s5 = inlined_call_operand.vmem [shape: s32[32,1], index: 5, kind: input, shape index: {}]
  %s6 = inlined_call_operand.hbm [shape: f32[2,8,128], index: 6, kind: output, shape index: {}]
  %s7 = sld [smem:[#allocation0]]
  $region57: #{tpu_custom_call.1} parent=0
    _
  %s9 = ssub.s32 1, %s7
  %s10 = scalar_select 0, %s9, %s7
  $region1: #{tpu_custom_call.1} parent=0
    #allocation2 [shape = 'u8[8192]{0}', space=vmem, size = 0x2000, scoped, tag = 'output window, operand 0']
    #allocation3 [shape = 's32[2]{0}', space=sflag, size = 0x8, scoped, tag = 'scoped memory for tpu_custom_call.1']
    %11 = vsyncpa [#allocation3], 0
    %s12 = scalar_lea.sflag [#allocation3], 1
    %13 = vsyncpa %s12, 0
    loop: start=0, step=1, limit=4
    $region2: #{tpu_custom_call.1} parent=1 // loop_pre_header
      _
    $region3: #{tpu_custom_call.1} parent=1 // loop_header
      %s15 = sphi 0, %s19
      %p16 = scmp.ge.s32.totalorder %s15, 4
      %s25 = sphi 0, %s27
      %s28 = sphi 0, %s25
      %s29 = sphi 0, %s28
      %s45 = sphi 0, %s29
      %s49 = sphi 0, %s49
      %s51 = sphi 0, %s49
      %s52 = sphi 0, %s51
      %s66 = sphi 0, %s52
      %s70 = sphi 0, %s70
      %s72 = sphi 0, %s70
      %s73 = sphi 0, %s72
      %s87 = sphi 0, %s73
      %s91 = sphi 0, %s91
      %s93 = sphi 0, %s91
      %s94 = sphi 0, %s93
      %s108 = sphi 0, %s94
      %s112 = sphi 0, %s112
      %s114 = sphi 0, %s112
      %s115 = sphi 0, %s114
      %s129 = sphi 0, %s115
      %s135 = sphi 0, %s137
      %s138 = sphi 0, %s135
      %s139 = sphi 0, %s138
      %s155 = sphi 0, %s139
      %s161 = sphi 0, %s163
      %s164 = sphi 0, %s161
      %s165 = sphi 0, %s164
      %s181 = sphi 0, %s165
    $region4: #{tpu_custom_call.1} parent=1 // loop_header_branch
      %18 = sbr.rel (%p16) target = $region8
    $region5: #{tpu_custom_call.1} parent=1 // loop_body
      %s20 = ssub.s32 %s15, 1
      %s21 = ssub.s32 %s15, 2
      %s22 = sadd.s32 %s15, 1
      %s23 = ssub.s32 %s15, %s22
      %p24 = scmp.eq.s32.totalorder %s23, 0
      %s26 = sadd.s32 %s25, 1
      %s27 = scalar_select %p24, %s25, %s26
      %p30 = pneg %p24
      %p31 = scmp.eq.s32.totalorder %s15, 1
      %p32 = por %p30, %p31
      %p33 = scmp.ne.s32.totalorder %s25, %s28
      %p34 = scmp.eq.s32.totalorder %s15, 0
      %p35 = por %p33, %p34
      %p36 = scmp.ne.s32.totalorder %s25, %s28
      %p37 = scmp.eq.s32.totalorder %s20, 1
      %p38 = por %p36, %p37
      %p39 = scmp.ne.s32.totalorder %s28, %s29
      %p40 = scmp.eq.s32.totalorder %s20, 0
      %p41 = por %p39, %p40
      %p42 = scmp.ne.s32.totalorder %s28, %s29
      %p43 = scmp.eq.s32.totalorder %s21, 1
      %p44 = por %p42, %p43
      %p46 = scmp.ne.s32.totalorder %s29, %s45
      %p47 = scmp.eq.s32.totalorder %s21, 0
      %p48 = por %p46, %p47
      %s50 = sadd.s32 %s49, 1
      %p53 = scmp.eq.s32.totalorder %s15, 1
      %p54 = scmp.ne.s32.totalorder %s49, %s51
      %p55 = scmp.eq.s32.totalorder %s15, 0
      %p56 = por %p54, %p55
      %p57 = scmp.ne.s32.totalorder %s49, %s51
      %p58 = scmp.eq.s32.totalorder %s20, 1
      %p59 = por %p57, %p58
      %p60 = scmp.ne.s32.totalorder %s51, %s52
      %p61 = scmp.eq.s32.totalorder %s20, 0
      %p62 = por %p60, %p61
      %p63 = scmp.ne.s32.totalorder %s51, %s52
      %p64 = scmp.eq.s32.totalorder %s21, 1
      %p65 = por %p63, %p64
      %p67 = scmp.ne.s32.totalorder %s52, %s66
      %p68 = scmp.eq.s32.totalorder %s21, 0
      %p69 = por %p67, %p68
      %s71 = sadd.s32 %s70, 1
      %p74 = scmp.eq.s32.totalorder %s15, 1
      %p75 = scmp.ne.s32.totalorder %s70, %s72
      %p76 = scmp.eq.s32.totalorder %s15, 0
      %p77 = por %p75, %p76
      %p78 = scmp.ne.s32.totalorder %s70, %s72
      %p79 = scmp.eq.s32.totalorder %s20, 1
      %p80 = por %p78, %p79
      %p81 = scmp.ne.s32.totalorder %s72, %s73
      %p82 = scmp.eq.s32.totalorder %s20, 0
      %p83 = por %p81, %p82
      %p84 = scmp.ne.s32.totalorder %s72, %s73
      %p85 = scmp.eq.s32.totalorder %s21, 1
      %p86 = por %p84, %p85
      %p88 = scmp.ne.s32.totalorder %s73, %s87
      %p89 = scmp.eq.s32.totalorder %s21, 0
      %p90 = por %p88, %p89
      %s92 = sadd.s32 %s91, 1
      %p95 = scmp.eq.s32.totalorder %s15, 1
      %p96 = scmp.ne.s32.totalorder %s91, %s93
      %p97 = scmp.eq.s32.totalorder %s15, 0
      %p98 = por %p96, %p97
      %p99 = scmp.ne.s32.totalorder %s91, %s93
      %p100 = scmp.eq.s32.totalorder %s20, 1
      %p101 = por %p99, %p100
      %p102 = scmp.ne.s32.totalorder %s93, %s94
      %p103 = scmp.eq.s32.totalorder %s20, 0
      %p104 = por %p102, %p103
      %p105 = scmp.ne.s32.totalorder %s93, %s94
      %p106 = scmp.eq.s32.totalorder %s21, 1
      %p107 = por %p105, %p106
      %p109 = scmp.ne.s32.totalorder %s94, %s108
      %p110 = scmp.eq.s32.totalorder %s21, 0
      %p111 = por %p109, %p110
      %s113 = sadd.s32 %s112, 1
      %p116 = scmp.eq.s32.totalorder %s15, 1
      %p117 = scmp.ne.s32.totalorder %s112, %s114
      %p118 = scmp.eq.s32.totalorder %s15, 0
      %p119 = por %p117, %p118
      %p120 = scmp.ne.s32.totalorder %s112, %s114
      %p121 = scmp.eq.s32.totalorder %s20, 1
      %p122 = por %p120, %p121
      %p123 = scmp.ne.s32.totalorder %s114, %s115
      %p124 = scmp.eq.s32.totalorder %s20, 0
      %p125 = por %p123, %p124
      %p126 = scmp.ne.s32.totalorder %s114, %s115
      %p127 = scmp.eq.s32.totalorder %s21, 1
      %p128 = por %p126, %p127
      %p130 = scmp.ne.s32.totalorder %s115, %s129
      %p131 = scmp.eq.s32.totalorder %s21, 0
      %p132 = por %p130, %p131
      %s133 = ssub.s32 %s15, %s22
      %p134 = scmp.eq.s32.totalorder %s133, 0
      %s136 = sadd.s32 %s135, 1
      %s137 = scalar_select %p134, %s135, %s136
      %p140 = pneg %p134
      %p141 = scmp.eq.s32.totalorder %s15, 1
      %p142 = por %p140, %p141
      %p143 = scmp.ne.s32.totalorder %s135, %s138
      %p144 = scmp.eq.s32.totalorder %s15, 0
      %p145 = por %p143, %p144
      %p146 = scmp.ne.s32.totalorder %s135, %s138
      %p147 = scmp.eq.s32.totalorder %s20, 1
      %p148 = por %p146, %p147
      %p149 = scmp.ne.s32.totalorder %s138, %s139
      %p150 = scmp.eq.s32.totalorder %s20, 0
      %p151 = por %p149, %p150
      %p152 = scmp.ne.s32.totalorder %s138, %s139
      %p153 = scmp.eq.s32.totalorder %s21, 1
      %p154 = por %p152, %p153
      %p156 = scmp.ne.s32.totalorder %s139, %s155
      %p157 = scmp.eq.s32.totalorder %s21, 0
      %p158 = por %p156, %p157
      %s159 = ssub.s32 %s15, %s22
      %p160 = scmp.eq.s32.totalorder %s159, 0
      %s162 = sadd.s32 %s161, 1
      %s163 = scalar_select %p160, %s161, %s162
      %p166 = pneg %p160
      %p167 = scmp.eq.s32.totalorder %s15, 1
      %p168 = por %p166, %p167
      %p169 = scmp.ne.s32.totalorder %s161, %s164
      %p170 = scmp.eq.s32.totalorder %s15, 0
      %p171 = por %p169, %p170
      %p172 = scmp.ne.s32.totalorder %s161, %s164
      %p173 = scmp.eq.s32.totalorder %s20, 1
      %p174 = por %p172, %p173
      %p175 = scmp.ne.s32.totalorder %s164, %s165
      %p176 = scmp.eq.s32.totalorder %s20, 0
      %p177 = por %p175, %p176
      %p178 = scmp.ne.s32.totalorder %s164, %s165
      %p179 = scmp.eq.s32.totalorder %s21, 1
      %p180 = por %p178, %p179
      %p182 = scmp.ne.s32.totalorder %s165, %s181
      %p183 = scmp.eq.s32.totalorder %s21, 0
      %p184 = por %p182, %p183
      %p185 = scmp.le.s32.totalorder 1, %s15
      %p186 = scmp.lt.s32.totalorder %s15, 3
      %p187 = pnand %p185, %p186
      %p188 = pneg %p187
      // Predicated region
      $region9: #{tpu_custom_call.1} parent=5 // pred_check
        _
      $region10: #{tpu_custom_call.1} parent=5 // pred_check_branch
        %190 = sbr.rel (%p187) target = $region12
      $region11: #{tpu_custom_call.1} parent=5 // pred_region
        %s191 = ssub.s32 %s15, 1
        // Predicated region
        $region13: #{tpu_custom_call.1} parent=11 // pred_check
          %p192 = pneg %p62
        $region14: #{tpu_custom_call.1} parent=11 // pred_check_branch
          %194 = sbr.rel (%p192) target = $region16
        $region15: #{tpu_custom_call.1} parent=11 // pred_region
          _
        $region16: #{tpu_custom_call.1} parent=11 // pred_fallthru
          _
        // Predicated region
        $region17: #{tpu_custom_call.1} parent=11 // pred_check
          %p195 = pneg %p83
        $region18: #{tpu_custom_call.1} parent=11 // pred_check_branch
          %197 = sbr.rel (%p195) target = $region20
        $region19: #{tpu_custom_call.1} parent=11 // pred_region
          _
        $region20: #{tpu_custom_call.1} parent=11 // pred_fallthru
          _
        // Predicated region
        $region21: #{tpu_custom_call.1} parent=11 // pred_check
          %p198 = pneg %p104
        $region22: #{tpu_custom_call.1} parent=11 // pred_check_branch
          %200 = sbr.rel (%p198) target = $region24
        $region23: #{tpu_custom_call.1} parent=11 // pred_region
          _
        $region24: #{tpu_custom_call.1} parent=11 // pred_fallthru
          _
        // Predicated region
        $region25: #{tpu_custom_call.1} parent=11 // pred_check
          %p201 = pneg %p125
        $region26: #{tpu_custom_call.1} parent=11 // pred_check_branch
          %203 = sbr.rel (%p201) target = $region28
        $region27: #{tpu_custom_call.1} parent=11 // pred_region
          _
        $region28: #{tpu_custom_call.1} parent=11 // pred_fallthru
          _
      $region12: #{tpu_custom_call.1} parent=5 // pred_fallthru
        _
      %p204 = scmp.lt.s32.totalorder %s15, 2
      // Predicated region
      $region29: #{tpu_custom_call.1} parent=5 // pred_check
        %p205 = pneg %p204
      $region30: #{tpu_custom_call.1} parent=5 // pred_check_branch
        %207 = sbr.rel (%p205) target = $region32
      $region31: #{tpu_custom_call.1} parent=5 // pred_region
        // Predicated region
        $region33: #{tpu_custom_call.1} parent=31 // pred_check
          %p208 = pneg %p35
        $region34: #{tpu_custom_call.1} parent=31 // pred_check_branch
          %210 = sbr.rel (%p208) target = $region36
        $region35: #{tpu_custom_call.1} parent=31 // pred_region
          %s211 = smul.u32 2, %s15
          %p212 = scmp.lt.s32.totalorder %s211, 3
          %s213 = scalar_select %p212, %s211, 3
          %s214 = smul.addr %s213, 4
          %s215 = scalar_lea.vmem %s0, %s214
          %s216 = smul.u32 2, %s15
        $region36: #{tpu_custom_call.1} parent=31 // pred_fallthru
          _
        // Predicated region
        $region37: #{tpu_custom_call.1} parent=31 // pred_check
          %p217 = pneg %p145
        $region38: #{tpu_custom_call.1} parent=31 // pred_check_branch
          %219 = sbr.rel (%p217) target = $region40
        $region39: #{tpu_custom_call.1} parent=31 // pred_region
          %s220 = smul.u32 2, %s15
          %p221 = scmp.lt.s32.totalorder %s220, 3
          %s222 = scalar_select %p221, %s220, 3
          %s223 = smul.addr %s222, 8
          %s224 = scalar_lea.vmem %s5, %s223
          %s225 = smul.u32 2, %s15
        $region40: #{tpu_custom_call.1} parent=31 // pred_fallthru
          _
      $region32: #{tpu_custom_call.1} parent=5 // pred_fallthru
        _
      %p226 = scmp.le.s32.totalorder 1, %s15
      %p227 = scmp.lt.s32.totalorder %s15, 3
      %p228 = pnand %p226, %p227
      %p229 = pneg %p228
      // Predicated region
      $region41: #{tpu_custom_call.1} parent=5 // pred_check
        _
      $region42: #{tpu_custom_call.1} parent=5 // pred_check_branch
        %231 = sbr.rel (%p228) target = $region44
      $region43: #{tpu_custom_call.1} parent=5 // pred_region
        %s232 = ssub.s32 %s15, 1
        %s233 = smul.u32 2, %s20
        %p234 = scmp.lt.s32.totalorder %s233, 3
        %s235 = scalar_select %p234, %s233, 3
        %s236 = smul.addr %s235, 4
        %s237 = scalar_lea.vmem %s0, %s236
        %p238 = pneg %p41
        %p239 = pneg %p38
        %p240 = pneg %p62
        %p241 = pneg %p59
        %p242 = pneg %p83
        %p243 = pneg %p80
        %p244 = pneg %p104
        %p245 = pneg %p101
        %p246 = pneg %p125
        %p247 = pneg %p122
        %s248 = smul.u32 2, %s20
        %p249 = scmp.lt.s32.totalorder %s248, 3
        %s250 = scalar_select %p249, %s248, 3
        %s251 = smul.addr %s250, 8
        %s252 = scalar_lea.vmem %s5, %s251
        %p253 = pneg %p151
        %p254 = pneg %p148
        %p255 = pneg %p177
        %p256 = pneg %p174
        %s257 = sand.u32 %s164, 1
        %s258 = scalar_lea.sflag [#allocation3], %s257
        %s259 = sand.u32 %s164, 1
        %s260 = smul.addr %s259, 8
        %s261 = scalar_lea.vmem [#allocation2], %s260
        %s262 = smul.u32 2, %s20
        %p263 = scmp.lt.s32.totalorder %s262, 3
        %s264 = scalar_select %p263, %s262, 3
        %s265 = smul.addr %s264, 4
        %s266 = scalar_lea.vmem %s0, %s265
        %s267 = smul.u32 2, %s20
        %s268 = smul.u32 2, %s20
        %p269 = scmp.lt.s32.totalorder %s268, 3
        %s270 = scalar_select %p269, %s268, 3
        %s271 = smul.addr %s270, 8
        %s272 = scalar_lea.vmem %s5, %s271
        %s273 = smul.u32 2, %s20
        %v275 = vld [vmem:[%s266] sm:$0xf]
        %v276 = vld [vmem:[%s266 + $0x4] sm:$0xf]
        %v277 = vld [vmem:[%s1] sm:$0xf]
        %v278 = vld [vmem:[%s1 + $0x4] sm:$0xf]
        %v279 = vld [vmem:[%s1 + $0x8] sm:$0xf]
        %v280 = vld [vmem:[%s1 + $0xc] sm:$0xf]
        %v281 = vld [vmem:[%s2] sm:$0x1]
        %v283 = vlaneseq
        %v284 = vshrl.u32 %v283, 7
        %v285 = vsub.s32 0, %v284
        %v286 = vrot.slane %v281, %v285
        %v290 = vunpack.c.l.b16 %v275
        %v291 = vunpack.c.l.b16 %v276
        %v292 = vpack.c.b16 %v291, %v290
        %v297 = vunpack.c.l.b16 %v277
        %v298 = vunpack.c.l.b16 %v278
        %v299 = vunpack.c.l.b16 %v279
        %v300 = vunpack.c.l.b16 %v280
        %v301 = vpack.c.b16 %v298, %v297
        %v302 = vpack.c.b16 %v300, %v299
        %vm305 = vcmask 261120
        %v307 = vsel %vm305, %v292, 0
        %309 = vmatprep.subr.bf16.mxu0 0
        %310 = vmatpush1.bf16.msra.mxu0 0
        %311 = vmatprep.subr.bf16.mxu0 0
        %312 = vmatpush1.bf16.msra.mxu0 0
        %313 = vmatprep.subr.bf16.mxu0 0
        %314 = vmatpush1.bf16.msra.mxu0 0
        %315 = vmatprep.subr.bf16.mxu0 0
        %316 = vmatpush1.bf16.msra.mxu0 0
        %317 = vmatprep.subr.bf16.mxu0 0
        %318 = vmatpush1.bf16.msra.mxu0 0
        %319 = vmatprep.subr.bf16.mxu0 0
        %320 = vmatpush1.bf16.msra.mxu0 0
        %321 = vmatprep.subr.bf16.mxu0 0
        %322 = vmatpush1.bf16.msra.mxu0 %v302
        %323 = vmatprep.subr.bf16.mxu0 0
        %324 = vmatpush1.bf16.msra.mxu0 %v301
        %325 = vmatprep.subr.bf16.mxu0 0
        %326 = vmatpush2.bf16.msra.mxu0 0
        %327 = vmatprep.subr.bf16.mxu0 0
        %328 = vmatpush2.bf16.msra.mxu0 0
        %329 = vmatprep.subr.bf16.mxu0 0
        %330 = vmatpush2.bf16.msra.mxu0 0
        %331 = vmatprep.subr.bf16.mxu0 0
        %332 = vmatpush2.bf16.msra.mxu0 0
        %333 = vmatprep.subr.bf16.mxu0 0
        %334 = vmatpush2.bf16.msra.mxu0 0
        %335 = vmatprep.subr.bf16.mxu0 0
        %336 = vmatpush2.bf16.msra.mxu0 0
        %337 = vmatprep.subr.bf16.mxu0 0
        %338 = vmatpush2.bf16.msra.mxu0 0
        %339 = vmatprep.subr.bf16.mxu0 0
        %340 = vmatpush2.bf16.msra.mxu0 0
        %341 = vmatprep.mubr.bf16.mxu0 0
        %342 = vmatmul.mubr.bf16.gmra.mxu0 %v307
        %v343 = vpop.f32.mrf.mxu0
        %v344 = vadd.f32 %v286, %v343
        %v345 = vpop.f32.mrf.mxu0
        %v346 = vpop.f32.mrf.mxu0
        %v347 = vadd.f32 %v286, %v346
        %v348 = vpop.f32.mrf.mxu0
        %349 = vdwg.mxu0
        %vm350 = vcmp.gt.f32.partialorder %v344, 0.0
        %vm351 = vcmp.gt.f32.partialorder %v347, 0.0
        %v352 = vmul.f32 %v344, 0.01
        %v353 = vmul.f32 %v347, 0.01
        %v354 = vsel %vm350, %v344, %v352
        %v355 = vsel %vm351, %v347, %v353
        %v356 = vpack.c.bf16 %v355, %v354
        %v357 = vld [vmem:[%s3] sm:$0xf]
        %v358 = vld [vmem:[%s3 + $0x4] sm:$0xf]
        %v359 = vld [vmem:[%s3 + $0x8] sm:$0xf]
        %v360 = vld [vmem:[%s3 + $0xc] sm:$0xf]
        %v361 = vld [vmem:[%s4] sm:$0x1]
        %v363 = vlaneseq
        %v364 = vshrl.u32 %v363, 7
        %v365 = vsub.s32 0, %v364
        %v366 = vrot.slane %v361, %v365
        %v372 = vunpack.c.l.b16 %v357
        %v373 = vunpack.c.l.b16 %v358
        %v374 = vunpack.c.l.b16 %v359
        %v375 = vunpack.c.l.b16 %v360
        %v376 = vpack.c.b16 %v373, %v372
        %v377 = vpack.c.b16 %v375, %v374
        %v381 = vsel %vm305, %v356, 0
        %383 = vmatprep.subr.bf16.mxu0 0
        %384 = vmatpush1.bf16.msra.mxu0 0
        %385 = vmatprep.subr.bf16.mxu0 0
        %386 = vmatpush1.bf16.msra.mxu0 0
        %387 = vmatprep.subr.bf16.mxu0 0
        %388 = vmatpush1.bf16.msra.mxu0 0
        %389 = vmatprep.subr.bf16.mxu0 0
        %390 = vmatpush1.bf16.msra.mxu0 0
        %391 = vmatprep.subr.bf16.mxu0 0
        %392 = vmatpush1.bf16.msra.mxu0 0
        %393 = vmatprep.subr.bf16.mxu0 0
        %394 = vmatpush1.bf16.msra.mxu0 0
        %395 = vmatprep.subr.bf16.mxu0 0
        %396 = vmatpush1.bf16.msra.mxu0 %v377
        %397 = vmatprep.subr.bf16.mxu0 0
        %398 = vmatpush1.bf16.msra.mxu0 %v376
        %399 = vmatprep.subr.bf16.mxu0 0
        %400 = vmatpush2.bf16.msra.mxu0 0
        %401 = vmatprep.subr.bf16.mxu0 0
        %402 = vmatpush2.bf16.msra.mxu0 0
        %403 = vmatprep.subr.bf16.mxu0 0
        %404 = vmatpush2.bf16.msra.mxu0 0
        %405 = vmatprep.subr.bf16.mxu0 0
        %406 = vmatpush2.bf16.msra.mxu0 0
        %407 = vmatprep.subr.bf16.mxu0 0
        %408 = vmatpush2.bf16.msra.mxu0 0
        %409 = vmatprep.subr.bf16.mxu0 0
        %410 = vmatpush2.bf16.msra.mxu0 0
        %411 = vmatprep.subr.bf16.mxu0 0
        %412 = vmatpush2.bf16.msra.mxu0 0
        %413 = vmatprep.subr.bf16.mxu0 0
        %414 = vmatpush2.bf16.msra.mxu0 0
        %415 = vmatprep.mubr.bf16.mxu0 0
        %416 = vmatmul.mubr.bf16.gmra.mxu0 %v381
        %v417 = vpop.f32.mrf.mxu0
        %v418 = vadd.f32 %v366, %v417
        %v419 = vpop.f32.mrf.mxu0
        %v420 = vpop.f32.mrf.mxu0
        %v421 = vadd.f32 %v366, %v420
        %v422 = vpop.f32.mrf.mxu0
        %423 = vdwg.mxu0
        %vm424 = vcmask 89088
        %v425 = vsel %vm424, %v418, -inf
        %426 = vmax.xlane.f32.xlu0 %v425
        %v427 = vpop.xlane.xlu0 %426
        %v428 = vsel %vm424, %v421, -inf
        %429 = vmax.xlane.f32.xlu0 %v428
        %v430 = vpop.xlane.xlu0 %429
        %v431 = vsub.f32 %v418, %v427
        %v432 = vsub.f32 %v421, %v430
        %v433 = vmul.f32 %v431, 1.442695
        %v434 = vpow.pop %v433
        %v435 = vmul.f32 %v432, 1.442695
        %v436 = vpow.pop %v435
        %v437 = vsel %vm424, %v434, 0.0
        %438 = vadd.xlane.f32.xlu0 %v437
        %v439 = vpop.xlane.xlu0 %438
        %v440 = vsel %vm424, %v436, 0.0
        %441 = vadd.xlane.f32.xlu0 %v440
        %v442 = vpop.xlane.xlu0 %441
        %v443 = vlog2.pop %v439
        %v444 = vmul.f32 %v443, 0.6931472
        %v445 = vlog2.pop %v442
        %v446 = vmul.f32 %v445, 0.6931472
        %v447 = vadd.f32 %v427, %v444
        %v448 = vadd.f32 %v430, %v446
        %v449 = vld [vmem:[%s272] sm:$0xff]
        %v450 = vld [vmem:[%s272 + $0x8] sm:$0xff]
        %v451 = vlaneseq
        %v452 = vand.u32 %v451, 127
        %453 = vset.pattern.permute.xlu0 0
        %454 = vperm.xlu0 %453, %v449
        %v455 = vpop.permute.xlu0 %454
        %456 = vset.pattern.permute.xlu0 0
        %457 = vperm.xlu0 %456, %v450
        %v458 = vpop.permute.xlu0 %457
        %vm459 = vcmp.eq.s32.totalorder %v452, %v455
        %vm460 = vcmp.eq.s32.totalorder %v452, %v458
        %v461 = vsel %vm459, 1, 0
        %v462 = vsel %vm460, 1, 0
        %v463 = vcvt.s32.f32 %v461
        %v464 = vcvt.s32.f32 %v462
        %v465 = vmul.f32 %v418, %v463
        %v466 = vmul.f32 %v421, %v464
        %v467 = vsel %vm424, %v465, 0.0
        %468 = vadd.xlane.f32.xlu0 %v467
        %v469 = vpop.xlane.xlu0 %468
        %v470 = vsel %vm424, %v466, 0.0
        %471 = vadd.xlane.f32.xlu0 %v470
        %v472 = vpop.xlane.xlu0 %471
        %vm473 = vcmp.ge.s32.totalorder %v449, 0
        %vm474 = vcmp.ge.s32.totalorder %v450, 0
        %v475 = vsel %vm473, 1, 0
        %v476 = vsel %vm474, 1, 0
        %v477 = vcvt.s32.f32 %v475
        %v478 = vcvt.s32.f32 %v476
        %v479 = vsub.f32 %v447, %v469
        %v480 = vsub.f32 %v448, %v472
        %v481 = vmul.f32 %v479, %v477
        %v482 = vmul.f32 %v480, %v478
        %vm483 = vcmask 7168
        %v484 = vsel %vm483, %v481, 0.0
        %v485 = vsel %vm483, %v482, 0.0
        %v486 = vadd.f32 %v484, %v485
        %487 = vadd.xlane.f32.xlu0 %v486
        %v488 = vpop.xlane.xlu0 %487
        %v489 = vrot.slane %v488, 4
        %v490 = vadd.f32 %v488, %v489
        %v491 = vrot.slane %v490, 2
        %v492 = vadd.f32 %v490, %v491
        %v493 = vrot.slane %v492, 1
        %v494 = vadd.f32 %v492, %v493
        %s495 = vtos %v494
        %v496 = vlaneseq
        %v497 = vshrl.u32 %v496, 7
        %vm498 = vcmp.eq.s32.totalorder %v497, 0
        %vm499 = vcmp.eq.s32.totalorder %v452, 0
        %vm500 = vmand %vm498, %vm499
        %v501 = vstv %s495
        %v502 = vsel %vm500, %v501, 0.0
        %503 = vst [vmem:[%s261] sm:$0xff] %v502
        %s504 = sand.u32 %s164, 1
        %s505 = scalar_lea.sflag [#allocation3], %s504
        %s506 = sand.u32 %s164, 1
        %s507 = smul.addr %s506, 8
        %s508 = scalar_lea.vmem [#allocation2], %s507
        // Predicated region
        $region45: #{tpu_custom_call.1} parent=43 // pred_check
          %p509 = pneg %p174
        $region46: #{tpu_custom_call.1} parent=43 // pred_check_branch
          %511 = sbr.rel (%p509) target = $region48
        $region47: #{tpu_custom_call.1} parent=43 // pred_region
          %s513 = ssub.s32 128, 128
          %514 = vsyncadd %s505, %s513
          %s515 = smul.addr %s20, 128
          %s516 = scalar_lea.hbm %s6, %s515
          %s518 = sshll.u32 %s508, 4
          %s519 = int_to_ptr.vmem [resolvable:$true] %s518
          %521 = dma.vmem_to_hbm [thread:$0]  %s519, 128, %s516, %s505
        $region48: #{tpu_custom_call.1} parent=43 // pred_fallthru
          _
      $region44: #{tpu_custom_call.1} parent=5 // pred_fallthru
        _
      %p522 = scmp.le.s32.totalorder 2, %s15
      // Predicated region
      $region49: #{tpu_custom_call.1} parent=5 // pred_check
        %p523 = pneg %p522
      $region50: #{tpu_custom_call.1} parent=5 // pred_check_branch
        %525 = sbr.rel (%p523) target = $region52
      $region51: #{tpu_custom_call.1} parent=5 // pred_region
        %s526 = ssub.s32 %s15, 2
        // Predicated region
        $region53: #{tpu_custom_call.1} parent=51 // pred_check
          %p527 = pneg %p180
        $region54: #{tpu_custom_call.1} parent=51 // pred_check_branch
          %529 = sbr.rel (%p527) target = $region56
        $region55: #{tpu_custom_call.1} parent=51 // pred_region
          %s530 = sand.u32 %s165, 1
          %s531 = scalar_lea.sflag [#allocation3], %s530
          %s532 = sand.u32 %s165, 1
          %s533 = smul.addr %s532, 8
          %s534 = scalar_lea.vmem [#allocation2], %s533
          %535 = dma.done %s531, 128
        $region56: #{tpu_custom_call.1} parent=51 // pred_fallthru
          _
      $region52: #{tpu_custom_call.1} parent=5 // pred_fallthru
        _
    $region6: #{tpu_custom_call.1} parent=1 // loop_footer
      %s19 = sadd.s32 1, %s15
    $region7: #{tpu_custom_call.1} parent=1 // loop_footer_branch
      %14 = sbr.rel target = $region3
    $region8: #{tpu_custom_call.1} parent=1 // loop_exit
      _
    %536 = vsyncpa [#allocation3], 1
    %s537 = scalar_lea.sflag [#allocation3], 1
    %538 = vsyncpa %s537, 1

</llo_original>
